<compile_context>
chip_gen: v7x
topology: tpu7x:2x2x1
jax: 0.10.0
libtpu: 0.0.40
codegen_flags: <defaults>
</compile_context>

<pallas_src>
import math

import jax
import jax.numpy as jnp
from jax.experimental import pallas as pl
from jax.experimental.pallas import tpu as pltpu

# ----------------------- model hyper-parameters (small) -----------------------
B = 2            # batch
S = 8            # sequence length
H = 32           # hidden_size (all_head_size)
NH = 4           # num_attention_heads
HD = H // NH     # attention_head_size
X = NH * S       # widened "all heads" key axis


# --------------------------------- kernel ------------------------------------
def cross_self_attention_kernel(x_ref, mask_ref, wqkv_ref, bqkv_ref,
                                bm_ref, gsum_ref, out_ref):
    # Fused Q|K|V projection: one MXU op.  Q columns already carry 1/sqrt(HD).
    qkv = jnp.dot(x_ref[...], wqkv_ref[...],
                  preferred_element_type=jnp.float32) + bqkv_ref[...]   # (B*S, 3H)
    qkv = qkv.reshape(B, S, 3 * H)                 # leading-dim split only

    q = qkv[:, :, :H]                              # (B, S, H)  aligned 32-lane slices
    k = qkv[:, :, H:2 * H]
    v = qkv[:, :, 2 * H:]

    # Block-diagonal layout: row x = h*S + kk of K/V keeps only head h's columns,
    # so ALL heads are handled by the same batched matmuls / one softmax.
    bm = bm_ref[...]                               # (X, H) 0/1 head mask
    k_big = jnp.concatenate([k] * NH, axis=1) * bm # (B, X, H)
    v_big = jnp.concatenate([v] * NH, axis=1) * bm # (B, X, H)

    # scores[b, q, h*S + kk] = <q_h[b, q], k_h[b, kk]>  (already scaled)
    scores = jnp.einsum("bqc,bxc->bqx", q, k_big,
                        preferred_element_type=jnp.float32)             # (B, S, X)
    scores = scores + mask_ref[...]                # (B, 1, X) additive mask, added once

    # Shift by the per-row max over all heads (softmax is shift-invariant per
    # head group): prevents exp overflow and handles fully-masked rows.
    scores = scores - jnp.max(scores, axis=-1, keepdims=True)
    e = jnp.exp(scores)                            # one EUP pass for every head

    # Per-head denominators via the 0/1 group-sum matrix (MXU), result already
    # broadcast onto every lane of its group -> no XLU segment reduce needed.
    denom = jnp.dot(e.reshape(B * S, X), gsum_ref[...],
                    preferred_element_type=jnp.float32).reshape(B, S, X)
    probs = e * pl.reciprocal(denom, approx=True)

    # PV matmul lands directly in merged-head (B, S, H) layout: one full store.
    out_ref[...] = jnp.einsum("bqx,bxc->bqc", probs, v_big,
                              preferred_element_type=jnp.float32)


# ------------------------------ param packing ---------------------------------
def pack_params(params):
    """One-time packing of weights + constant matrices (hoisted off the hot path)."""
    scale = 1.0 / math.sqrt(HD)
    wqkv = jnp.concatenate(
        [params["wq"] * scale, params["wk"], params["wv"]], axis=1)     # (H, 3H)
    bqkv = jnp.concatenate(
        [params["bq"] * scale, params["bk"], params["bv"]], axis=1)     # (1, 3H)

    x_head = jnp.arange(X) // S                    # head id of each widened-key lane
    c_head = jnp.arange(H) // HD                   # head id of each feature column
    bm = (x_head[:, None] == c_head[None, :]).astype(jnp.float32)       # (X, H)
    gsum = (x_head[:, None] == x_head[None, :]).astype(jnp.float32)     # (X, X)
    return {"wqkv": wqkv, "bqkv": bqkv, "bm": bm, "gsum": gsum}


# --------------------------------- wrapper ------------------------------------
@jax.jit
def cross_self_attention(hidden_states, attention_mask, packed):
    """hidden_states: (B, S, H) f32; attention_mask: (B, 1, 1, S) additive mask."""
    x2d = hidden_states.astype(jnp.float32).reshape(B * S, H)
    mask = attention_mask.astype(jnp.float32).reshape(B, 1, S)
    mask_big = jnp.tile(mask, (1, 1, NH))          # (B, 1, NH*S): replicated per head

    vmem = lambda: pl.BlockSpec(memory_space=pltpu.MemorySpace.VMEM)
    fn = pl.pallas_call(
        cross_self_attention_kernel,
        out_shape=jax.ShapeDtypeStruct((B, S, H), jnp.float32),
        in_specs=[vmem()] * 6,
        out_specs=vmem(),
    )
    return fn(x2d, mask_big, packed["wqkv"], packed["bqkv"],
              packed["bm"], packed["gsum"])


# ------------------------- pure-JAX reference (checking) ----------------------
def cross_self_attention_ref(x, mask, p):
    q = x @ p["wq"] + p["bq"]
    k = x @ p["wk"] + p["bk"]
    v = x @ p["wv"] + p["bv"]

    def split(t):  # (B,S,H) -> (B,NH,S,HD)
        return t.reshape(B, S, NH, HD).transpose(0, 2, 1, 3)

    qh, kh, vh = split(q), split(k), split(v)
    scores = jnp.einsum("bnqd,bnkd->bnqk", qh, kh) / math.sqrt(HD)
    scores = scores + mask                          # (B,1,1,S) broadcast
    probs = jax.nn.softmax(scores, axis=-1)
    ctx = jnp.einsum("bnqk,bnkd->bnqd", probs, vh)
    return ctx.transpose(0, 2, 1, 3).reshape(B, S, H)


# ----------------------------------- main --------------------------------------
if __name__ == "__main__":
    key = jax.random.PRNGKey(0)
    keys = jax.random.split(key, 8)

    def init(k, shape, scale=0.05):
        return (scale * jax.random.normal(k, shape)).astype(jnp.float32)

    params = {
        "wq": init(keys[0], (H, H)), "bq": init(keys[1], (1, H)),
        "wk": init(keys[2], (H, H)), "bk": init(keys[3], (1, H)),
        "wv": init(keys[4], (H, H)), "bv": init(keys[5], (1, H)),
    }
    packed = pack_params(params)                    # one-time, off the hot path

    x = jax.random.normal(keys[6], (B, S, H), jnp.float32)
    # BERT-style additive mask: last two key positions of batch 1 are masked out.
    keep = jnp.ones((B, 1, 1, S), jnp.float32)
    keep = keep.at[1, 0, 0, -2:].set(0.0)
    attn_mask = (1.0 - keep) * -10000.0

    y = cross_self_attention(x, attn_mask, packed)
    y = jax.block_until_ready(y)

    y_ref = cross_self_attention_ref(x, attn_mask, params)
    assert y.shape == (B, S, H)
    # Tolerance covers the EUP approximate reciprocal used for the softmax denom.
    assert jnp.allclose(y, y_ref, atol=2e-3, rtol=2e-3), (
        f"max abs diff {jnp.max(jnp.abs(y - y_ref))}"
    )
    print("KERNEL_OK")
</pallas_src>

<mosaic_0001>
module attributes {stable_mosaic.version = 11 : i64} {
  func.func @cross_self_attention_kernel(%arg0: memref<16x32xf32, #tpu.memory_space<vmem>>, %arg1: memref<2x1x32xf32, #tpu.memory_space<vmem>>, %arg2: memref<32x96xf32, #tpu.memory_space<vmem>>, %arg3: memref<1x96xf32, #tpu.memory_space<vmem>>, %arg4: memref<32x32xf32, #tpu.memory_space<vmem>>, %arg5: memref<32x32xf32, #tpu.memory_space<vmem>>, %arg6: memref<2x8x32xf32, #tpu.memory_space<vmem>>) attributes {dimension_semantics = [], scalar_prefetch = 0 : i64, scratch_operands = 0 : i64, tpu.core_type = #tpu.core_type<tc>} {
    %c0 = arith.constant 0 : index
    %c0_0 = arith.constant 0 : index
    %0 = vector.load %arg0[%c0, %c0_0] : memref<16x32xf32, #tpu.memory_space<vmem>>, vector<16x32xf32>
    %c0_1 = arith.constant 0 : index
    %c0_2 = arith.constant 0 : index
    %1 = vector.load %arg2[%c0_1, %c0_2] : memref<32x96xf32, #tpu.memory_space<vmem>>, vector<32x96xf32>
    %cst = arith.constant dense<0.000000e+00> : vector<16x96xf32>
    %2 = tpu.matmul %0, %1, %cst {dimension_numbers = #tpu.dot_dimension_numbers<[1], [0], [0], [1], [0, 0, 1, 1], [], []>} : vector<16x32xf32>, vector<32x96xf32>, vector<16x96xf32> -> vector<16x96xf32>
    %c0_3 = arith.constant 0 : index
    %c0_4 = arith.constant 0 : index
    %3 = vector.load %arg3[%c0_3, %c0_4] : memref<1x96xf32, #tpu.memory_space<vmem>>, vector<1x96xf32>
    %4 = vector.broadcast %3 : vector<1x96xf32> to vector<16x96xf32>
    %5 = arith.addf %2, %4 : vector<16x96xf32>
    %6 = vector.shape_cast %5 : vector<16x96xf32> to vector<2x8x96xf32>
    %7 = vector.extract_strided_slice %6 {offsets = [0, 0, 0], sizes = [2, 8, 32], strides = [1, 1, 1]} : vector<2x8x96xf32> to vector<2x8x32xf32>
    %8 = vector.extract_strided_slice %6 {offsets = [0, 0, 32], sizes = [2, 8, 32], strides = [1, 1, 1]} : vector<2x8x96xf32> to vector<2x8x32xf32>
    %9 = vector.extract_strided_slice %6 {offsets = [0, 0, 64], sizes = [2, 8, 32], strides = [1, 1, 1]} : vector<2x8x96xf32> to vector<2x8x32xf32>
    %c0_5 = arith.constant 0 : index
    %c0_6 = arith.constant 0 : index
    %10 = vector.load %arg4[%c0_5, %c0_6] : memref<32x32xf32, #tpu.memory_space<vmem>>, vector<32x32xf32>
    %11 = tpu.concatenate %8, %8, %8, %8 in 1 : vector<2x8x32xf32>, vector<2x8x32xf32>, vector<2x8x32xf32>, vector<2x8x32xf32> -> vector<2x32x32xf32>
    %12 = vector.shape_cast %10 : vector<32x32xf32> to vector<1x32x32xf32>
    %13 = vector.broadcast %12 : vector<1x32x32xf32> to vector<2x32x32xf32>
    %14 = arith.mulf %11, %13 : vector<2x32x32xf32>
    %15 = tpu.concatenate %9, %9, %9, %9 in 1 : vector<2x8x32xf32>, vector<2x8x32xf32>, vector<2x8x32xf32>, vector<2x8x32xf32> -> vector<2x32x32xf32>
    %16 = vector.shape_cast %10 : vector<32x32xf32> to vector<1x32x32xf32>
    %17 = vector.broadcast %16 : vector<1x32x32xf32> to vector<2x32x32xf32>
    %18 = arith.mulf %15, %17 : vector<2x32x32xf32>
    "tpu.trace_start"() <{level = 10 : i32, message = "bqc,bxc->bqx"}> : () -> ()
    %cst_7 = arith.constant dense<0.000000e+00> : vector<2x8x32xf32>
    %19 = tpu.matmul %7, %14, %cst_7 {dimension_numbers = #tpu.dot_dimension_numbers<[2], [2], [1], [1], [0, 0, 0, 1, 1, 1], [0], [0]>} : vector<2x8x32xf32>, vector<2x32x32xf32>, vector<2x8x32xf32> -> vector<2x8x32xf32>
    "tpu.trace_stop"() : () -> ()
    %c0_8 = arith.constant 0 : index
    %c0_9 = arith.constant 0 : index
    %c0_10 = arith.constant 0 : index
    %20 = vector.load %arg1[%c0_8, %c0_9, %c0_10] : memref<2x1x32xf32, #tpu.memory_space<vmem>>, vector<2x1x32xf32>
    %21 = vector.broadcast %20 : vector<2x1x32xf32> to vector<2x8x32xf32>
    %22 = arith.addf %19, %21 : vector<2x8x32xf32>
    %cst_11 = arith.constant dense<0xFF800000> : vector<2x8xf32>
    %23 = vector.multi_reduction <maximumf>, %22, %cst_11 [2] : vector<2x8x32xf32> to vector<2x8xf32>
    %24 = vector.shape_cast %23 : vector<2x8xf32> to vector<2x8x1xf32>
    %25 = vector.broadcast %24 : vector<2x8x1xf32> to vector<2x8x32xf32>
    %26 = arith.subf %22, %25 : vector<2x8x32xf32>
    %27 = math.exp %26 : vector<2x8x32xf32>
    %28 = vector.shape_cast %27 : vector<2x8x32xf32> to vector<16x32xf32>
    %c0_12 = arith.constant 0 : index
    %c0_13 = arith.constant 0 : index
    %29 = vector.load %arg5[%c0_12, %c0_13] : memref<32x32xf32, #tpu.memory_space<vmem>>, vector<32x32xf32>
    %cst_14 = arith.constant dense<0.000000e+00> : vector<16x32xf32>
    %30 = tpu.matmul %28, %29, %cst_14 {dimension_numbers = #tpu.dot_dimension_numbers<[1], [0], [0], [1], [0, 0, 1, 1], [], []>} : vector<16x32xf32>, vector<32x32xf32>, vector<16x32xf32> -> vector<16x32xf32>
    %31 = vector.shape_cast %30 : vector<16x32xf32> to vector<2x8x32xf32>
    %32 = tpu.reciprocal %31 {approx = true} : vector<2x8x32xf32> -> vector<2x8x32xf32>
    %33 = arith.mulf %27, %32 : vector<2x8x32xf32>
    "tpu.trace_start"() <{level = 10 : i32, message = "bqx,bxc->bqc"}> : () -> ()
    %cst_15 = arith.constant dense<0.000000e+00> : vector<2x8x32xf32>
    %34 = tpu.matmul %33, %18, %cst_15 {dimension_numbers = #tpu.dot_dimension_numbers<[2], [1], [1], [2], [0, 0, 0, 1, 1, 2], [0], [0]>} : vector<2x8x32xf32>, vector<2x32x32xf32>, vector<2x8x32xf32> -> vector<2x8x32xf32>
    "tpu.trace_stop"() : () -> ()
    %c0_16 = arith.constant 0 : index
    %c0_17 = arith.constant 0 : index
    %c0_18 = arith.constant 0 : index
    %35 = vector.load %arg6[%c0_16, %c0_17, %c0_18] : memref<2x8x32xf32, #tpu.memory_space<vmem>>, vector<2x8x32xf32>
    tpu.vector_store %arg6[%c0_16, %c0_17, %c0_18], %34 {strides = array<i32>} : memref<2x8x32xf32, #tpu.memory_space<vmem>>, vector<2x8x32xf32>,
    return
  }
}

</mosaic_0001>

<llo_original>
// kernel: cross_self_attention.1
$region0: #{cross_self_attention.1}
  #allocation0 [shape = 'u32[]', space=smem, size = 0x4, offset = 0x4, fixed_abs, tag = 'smem constant byte address 0x4 - core index']
  #allocation1 [shape = 'u32[144,128]{1,0:T(1,128)}', space=vmem, size = 0x12000, scoped, tag = 'internal scratch']
  %s0 = inlined_call_operand.vmem [shape: f32[16,32], index: 0, kind: input, shape index: {}]
  %s1 = inlined_call_operand.vmem [shape: f32[2,1,32], index: 1, kind: input, shape index: {}]
  %s2 = inlined_call_operand.vmem [shape: f32[32,96], index: 2, kind: input, shape index: {}]
  %s3 = inlined_call_operand.vmem [shape: f32[1,96], index: 3, kind: input, shape index: {}]
  %s4 = inlined_call_operand.hbm [shape: f32[32,32], index: 4, kind: input, shape index: {}]
  %s5 = inlined_call_operand.hbm [shape: f32[32,32], index: 5, kind: input, shape index: {}]
  %s6 = inlined_call_operand.hbm [shape: f32[2,8,32], index: 6, kind: output, shape index: {}]
  %s7 = sld [smem:[#allocation0]]
  $region42: #{cross_self_attention.1} parent=0
    _
  %s9 = ssub.s32 1, %s7
  %s10 = scalar_select 0, %s9, %s7
  $region1: #{cross_self_attention.1} parent=0
    #allocation2 [shape = 'u8[16384]{0}', space=vmem, size = 0x4000, scoped, tag = 'input window, operand 4, single buffered']
    #allocation3 [shape = 's32[1]{0}', space=sflag, size = 0x4, scoped, tag = 'scoped memory for cross_self_attention.1']
    #allocation4 [shape = 's32[1]{0}', space=sflag, size = 0x4, scoped, tag = 'scoped memory for cross_self_attention.1']
    #allocation5 [shape = 'u8[16384]{0}', space=vmem, size = 0x4000, scoped, tag = 'input window, operand 5, single buffered']
    #allocation6 [shape = 's32[1]{0}', space=sflag, size = 0x4, scoped, tag = 'scoped memory for cross_self_attention.1']
    #allocation7 [shape = 'u8[8192]{0}', space=vmem, size = 0x2000, scoped, tag = 'output window, operand 0, single buffered']
    %11 = vsyncpa [#allocation3], 0
    %12 = vsyncpa [#allocation6], 0
    %13 = vsyncpa [#allocation4], 0
    // Predicated region
    $region2: #{cross_self_attention.1} parent=1 // pred_check
      _
    $region3: #{cross_self_attention.1} parent=1 // pred_check_branch
      %15 = sbr.rel (0) target = $region5
    $region4: #{cross_self_attention.1} parent=1 // pred_region
      _
    $region5: #{cross_self_attention.1} parent=1 // pred_fallthru
      _
    // Predicated region
    $region6: #{cross_self_attention.1} parent=1 // pred_check
      _
    $region7: #{cross_self_attention.1} parent=1 // pred_check_branch
      %17 = sbr.rel (0) target = $region9
    $region8: #{cross_self_attention.1} parent=1 // pred_region
      _
    $region9: #{cross_self_attention.1} parent=1 // pred_fallthru
      _
    // Predicated region
    $region10: #{cross_self_attention.1} parent=1 // pred_check
      _
    $region11: #{cross_self_attention.1} parent=1 // pred_check_branch
      %19 = sbr.rel (0) target = $region13
    $region12: #{cross_self_attention.1} parent=1 // pred_region
      _
    $region13: #{cross_self_attention.1} parent=1 // pred_fallthru
      _
    // Predicated region
    $region14: #{cross_self_attention.1} parent=1 // pred_check
      _
    $region15: #{cross_self_attention.1} parent=1 // pred_check_branch
      %21 = sbr.rel (0) target = $region17
    $region16: #{cross_self_attention.1} parent=1 // pred_region
      _
    $region17: #{cross_self_attention.1} parent=1 // pred_fallthru
      _
    // Predicated region
    $region18: #{cross_self_attention.1} parent=1 // pred_check
      _
    $region19: #{cross_self_attention.1} parent=1 // pred_check_branch
      %23 = sbr.rel (0) target = $region21
    $region20: #{cross_self_attention.1} parent=1 // pred_region
      %s25 = ssub.s32 512, 512
      %26 = vsyncadd [#allocation3], %s25
      %s27 = sshll.u32 [#allocation2], 4
      %s28 = int_to_ptr.vmem [resolvable:$true] %s27
      %33 = dma.hbm_to_vmem [thread:$0]  %s4, 512, %s28, [#allocation3], 128, 128, 8
    $region21: #{cross_self_attention.1} parent=1 // pred_fallthru
      _
    // Predicated region
    $region22: #{cross_self_attention.1} parent=1 // pred_check
      _
    $region23: #{cross_self_attention.1} parent=1 // pred_check_branch
      %35 = sbr.rel (0) target = $region25
    $region24: #{cross_self_attention.1} parent=1 // pred_region
      %s37 = ssub.s32 512, 512
      %38 = vsyncadd [#allocation6], %s37
      %s39 = sshll.u32 [#allocation5], 4
      %s40 = int_to_ptr.vmem [resolvable:$true] %s39
      %45 = dma.hbm_to_vmem [thread:$0]  %s5, 512, %s40, [#allocation6], 128, 128, 8
    $region25: #{cross_self_attention.1} parent=1 // pred_fallthru
      _
    // Predicated region
    $region26: #{cross_self_attention.1} parent=1 // pred_check
      _
    $region27: #{cross_self_attention.1} parent=1 // pred_check_branch
      %47 = sbr.rel (0) target = $region29
    $region28: #{cross_self_attention.1} parent=1 // pred_region
      %48 = dma.done [#allocation3], 512
    $region29: #{cross_self_attention.1} parent=1 // pred_fallthru
      _
    // Predicated region
    $region30: #{cross_self_attention.1} parent=1 // pred_check
      _
    $region31: #{cross_self_attention.1} parent=1 // pred_check_branch
      %50 = sbr.rel (0) target = $region33
    $region32: #{cross_self_attention.1} parent=1 // pred_region
      %51 = dma.done [#allocation6], 512
    $region33: #{cross_self_attention.1} parent=1 // pred_fallthru
      _
    %v52 = vld [vmem:[%s0] sm:$0xff]
    %v53 = vld [vmem:[%s0 + $0x8] sm:$0xff]
    %v54 = vld [vmem:[%s2] sm:$0xff]
    %v55 = vld [vmem:[%s2 + $0x8] sm:$0xff]
    %v56 = vld [vmem:[%s2 + $0x10] sm:$0xff]
    %v57 = vld [vmem:[%s2 + $0x18] sm:$0xff]
    %v58 = vld [vmem:[%s3] sm:$0x1]
    %v60 = vlaneseq
    %v61 = vshrl.u32 %v60, 7
    %v62 = vsub.s32 0, %v61
    %v63 = vrot.slane %v58, %v62
    %vm65 = vcmask 261120
    %v67 = vsel %vm65, %v52, 0
    %v70 = vsel %vm65, %v53, 0
    %72 = vmatprep.subr.mxu0 0.0
    %73 = vmatpush1.msra.mxu0 %v54
    %74 = vmatprep.subr.mxu0 0.0
    %75 = vmatpush1.msra.mxu0 %v55
    %76 = vmatprep.subr.mxu0 0.0
    %77 = vmatpush1.msra.mxu0 %v56
    %78 = vmatprep.subr.mxu0 0.0
    %79 = vmatpush1.msra.mxu0 %v57
    %80 = vmatprep.subr.mxu0 0.0
    %81 = vmatpush1.msra.mxu0 0.0
    %82 = vmatprep.subr.mxu0 0.0
    %83 = vmatpush1.msra.mxu0 0.0
    %84 = vmatprep.subr.mxu0 0.0
    %85 = vmatpush1.msra.mxu0 0.0
    %86 = vmatprep.subr.mxu0 0.0
    %87 = vmatpush1.msra.mxu0 0.0
    %88 = vmatprep.subr.mxu0 0.0
    %89 = vmatpush1.msra.mxu0 0.0
    %90 = vmatprep.subr.mxu0 0.0
    %91 = vmatpush1.msra.mxu0 0.0
    %92 = vmatprep.subr.mxu0 0.0
    %93 = vmatpush1.msra.mxu0 0.0
    %94 = vmatprep.subr.mxu0 0.0
    %95 = vmatpush1.msra.mxu0 0.0
    %96 = vmatprep.subr.mxu0 0.0
    %97 = vmatpush1.msra.mxu0 0.0
    %98 = vmatprep.subr.mxu0 0.0
    %99 = vmatpush1.msra.mxu0 0.0
    %100 = vmatprep.subr.mxu0 0.0
    %101 = vmatpush1.msra.mxu0 0.0
    %102 = vmatprep.subr.mxu0 0.0
    %103 = vmatpush1.msra.mxu0 0.0
    %104 = vmatprep.subr.mxu0 0.0
    %105 = vmatpush1.msra.mxu0 0.0
    %106 = vmatprep.subr.mxu0 0.0
    %107 = vmatpush1.msra.mxu0 0.0
    %108 = vmatprep.subr.mxu0 0.0
    %109 = vmatpush1.msra.mxu0 0.0
    %110 = vmatprep.subr.mxu0 0.0
    %111 = vmatpush1.msra.mxu0 0.0
    %112 = vmatprep.subr.mxu0 0.0
    %113 = vmatpush1.msra.mxu0 0.0
    %114 = vmatprep.subr.mxu0 0.0
    %115 = vmatpush1.msra.mxu0 0.0
    %116 = vmatprep.subr.mxu0 0.0
    %117 = vmatpush1.msra.mxu0 0.0
    %118 = vmatprep.subr.mxu0 0.0
    %119 = vmatpush1.msra.mxu0 0.0
    %120 = vmatprep.subr.mxu0 0.0
    %121 = vmatpush1.msra.mxu0 0.0
    %122 = vmatprep.subr.mxu0 0.0
    %123 = vmatpush1.msra.mxu0 0.0
    %124 = vmatprep.subr.mxu0 0.0
    %125 = vmatpush1.msra.mxu0 0.0
    %126 = vmatprep.subr.mxu0 0.0
    %127 = vmatpush1.msra.mxu0 0.0
    %128 = vmatprep.subr.mxu0 0.0
    %129 = vmatpush1.msra.mxu0 0.0
    %130 = vmatprep.subr.mxu0 0.0
    %131 = vmatpush1.msra.mxu0 0.0
    %132 = vmatprep.subr.mxu0 0.0
    %133 = vmatpush1.msra.mxu0 0.0
    %134 = vmatprep.subr.mxu0 0.0
    %135 = vmatpush1.msra.mxu0 0.0
    %136 = vmatprep.mubr.f32.mxu0 0.0
    %137 = vmatmul.mubr.f32.gmra.mrb[0].mxu0 %v67
    %v138 = vpop.f32.mrb[0].mxu0
    %v139 = vadd.f32 %v63, %v138
    %v140 = vpop.f32.mrb[0].mxu0
    %141 = vmatprep.mubr.f32.mxu0 0.0
    %142 = vmatmul.mubr.f32.gmra.mrb[0].mxu0 %v70
    %v143 = vpop.f32.mrb[0].mxu0
    %v144 = vadd.f32 %v63, %v143
    %v145 = vpop.f32.mrb[0].mxu0
    %146 = vdwg.mxu0
    %v147 = vld [vmem:[#allocation2] sm:$0xff]
    %v148 = vld [vmem:[#allocation2 + $0x8] sm:$0xff]
    %v149 = vld [vmem:[#allocation2 + $0x10] sm:$0xff]
    %v150 = vld [vmem:[#allocation2 + $0x18] sm:$0xff]
    %155 = vrot.lane.b32.xlu0 %v147, 32
    %v156 = vpop.permute.xlu0 %155
    %157 = vrot.lane.b32.xlu0 %v148, 32
    %v158 = vpop.permute.xlu0 %157
    %159 = vrot.lane.b32.xlu0 %v149, 32
    %v160 = vpop.permute.xlu0 %159
    %161 = vrot.lane.b32.xlu0 %v150, 32
    %v162 = vpop.permute.xlu0 %161
    %v167 = vmul.f32 %v139, %v156
    %v168 = vmul.f32 %v139, %v158
    %v169 = vmul.f32 %v139, %v160
    %v170 = vmul.f32 %v139, %v162
    %v171 = vmul.f32 %v144, %v156
    %v172 = vmul.f32 %v144, %v158
    %v173 = vmul.f32 %v144, %v160
    %v174 = vmul.f32 %v144, %v162
    %175 = vrot.lane.b32.xlu0 %v147, 64
    %v176 = vpop.permute.xlu0 %175
    %177 = vrot.lane.b32.xlu0 %v148, 64
    %v178 = vpop.permute.xlu0 %177
    %179 = vrot.lane.b32.xlu0 %v149, 64
    %v180 = vpop.permute.xlu0 %179
    %181 = vrot.lane.b32.xlu0 %v150, 64
    %v182 = vpop.permute.xlu0 %181
    %v187 = vmul.f32 %v139, %v176
    %v188 = vmul.f32 %v139, %v178
    %v189 = vmul.f32 %v139, %v180
    %v190 = vmul.f32 %v139, %v182
    %v191 = vmul.f32 %v144, %v176
    %v192 = vmul.f32 %v144, %v178
    %v193 = vmul.f32 %v144, %v180
    %v194 = vmul.f32 %v144, %v182
    %v195 = vld [vmem:[%s1] sm:$0x1]
    %v196 = vld [vmem:[%s1 + $0x1] sm:$0x1]
    %v199 = vlaneseq
    %v200 = vshrl.u32 %v199, 7
    %v201 = vsub.s32 0, %v200
    %v202 = vrot.slane %v195, %v201
    %v203 = vlaneseq
    %v204 = vshrl.u32 %v203, 7
    %v205 = vsub.s32 0, %v204
    %v206 = vrot.slane %v196, %v205
    %213 = vrot.lane.b32.xlu0 %v167, 96
    %v214 = vpop.permute.xlu0 %213
    %215 = vrot.lane.b32.xlu0 %v168, 96
    %v216 = vpop.permute.xlu0 %215
    %217 = vrot.lane.b32.xlu0 %v169, 96
    %v218 = vpop.permute.xlu0 %217
    %219 = vrot.lane.b32.xlu0 %v170, 96
    %v220 = vpop.permute.xlu0 %219
    %v222 = vsel %vm65, %v139, 0
    %v224 = vsel %vm65, %v214, 0
    %v226 = vsel %vm65, %v216, 0
    %v228 = vsel %vm65, %v218, 0
    %v230 = vsel %vm65, %v220, 0
    %232 = vmatprep.subr.mxu0 0.0
    %233 = vmatpush1.xpose.msra.mxu0 %v224
    %234 = vmatprep.subr.mxu0 0.0
    %235 = vmatpush1.xpose.msra.mxu0 %v226
    %236 = vmatprep.subr.mxu0 0.0
    %237 = vmatpush1.xpose.msra.mxu0 %v228
    %238 = vmatprep.subr.mxu0 0.0
    %239 = vmatpush1.xpose.msra.mxu0 %v230
    %240 = vmatprep.subr.mxu0 0.0
    %241 = vmatpush1.xpose.msra.mxu0 0.0
    %242 = vmatprep.subr.mxu0 0.0
    %243 = vmatpush1.xpose.msra.mxu0 0.0
    %244 = vmatprep.subr.mxu0 0.0
    %245 = vmatpush1.xpose.msra.mxu0 0.0
    %246 = vmatprep.subr.mxu0 0.0
    %247 = vmatpush1.xpose.msra.mxu0 0.0
    %248 = vmatprep.subr.mxu0 0.0
    %249 = vmatpush1.xpose.msra.mxu0 0.0
    %250 = vmatprep.subr.mxu0 0.0
    %251 = vmatpush1.xpose.msra.mxu0 0.0
    %252 = vmatprep.subr.mxu0 0.0
    %253 = vmatpush1.xpose.msra.mxu0 0.0
    %254 = vmatprep.subr.mxu0 0.0
    %255 = vmatpush1.xpose.msra.mxu0 0.0
    %256 = vmatprep.subr.mxu0 0.0
    %257 = vmatpush1.xpose.msra.mxu0 0.0
    %258 = vmatprep.subr.mxu0 0.0
    %259 = vmatpush1.xpose.msra.mxu0 0.0
    %260 = vmatprep.subr.mxu0 0.0
    %261 = vmatpush1.xpose.msra.mxu0 0.0
    %262 = vmatprep.subr.mxu0 0.0
    %263 = vmatpush1.xpose.msra.mxu0 0.0
    %264 = vmatprep.subr.mxu0 0.0
    %265 = vmatpush1.xpose.msra.mxu0 0.0
    %266 = vmatprep.subr.mxu0 0.0
    %267 = vmatpush1.xpose.msra.mxu0 0.0
    %268 = vmatprep.subr.mxu0 0.0
    %269 = vmatpush1.xpose.msra.mxu0 0.0
    %270 = vmatprep.subr.mxu0 0.0
    %271 = vmatpush1.xpose.msra.mxu0 0.0
    %272 = vmatprep.subr.mxu0 0.0
    %273 = vmatpush1.xpose.msra.mxu0 0.0
    %274 = vmatprep.subr.mxu0 0.0
    %275 = vmatpush1.xpose.msra.mxu0 0.0
    %276 = vmatprep.subr.mxu0 0.0
    %277 = vmatpush1.xpose.msra.mxu0 0.0
    %278 = vmatprep.subr.mxu0 0.0
    %279 = vmatpush1.xpose.msra.mxu0 0.0
    %280 = vmatprep.subr.mxu0 0.0
    %281 = vmatpush1.xpose.msra.mxu0 0.0
    %282 = vmatprep.subr.mxu0 0.0
    %283 = vmatpush1.xpose.msra.mxu0 0.0
    %284 = vmatprep.subr.mxu0 0.0
    %285 = vmatpush1.xpose.msra.mxu0 0.0
    %286 = vmatprep.subr.mxu0 0.0
    %287 = vmatpush1.xpose.msra.mxu0 0.0
    %288 = vmatprep.subr.mxu0 0.0
    %289 = vmatpush1.xpose.msra.mxu0 0.0
    %290 = vmatprep.subr.mxu0 0.0
    %291 = vmatpush1.xpose.msra.mxu0 0.0
    %292 = vmatprep.subr.mxu0 0.0
    %293 = vmatpush1.xpose.msra.mxu0 0.0
    %294 = vmatprep.subr.mxu0 0.0
    %295 = vmatpush1.xpose.msra.mxu0 0.0
    %296 = vmatprep.mubr.f32.mxu0 0.0
    %297 = vmatmul.mubr.f32.gmra.mrb[0].mxu0 %v222
    %v298 = vpop.f32.mrb[0].mxu0
    %v299 = vadd.f32 %v202, %v298
    %v300 = vpop.f32.mrb[0].mxu0
    %301 = vdwg.mxu0
    %306 = vrot.lane.b32.xlu0 %v171, 96
    %v307 = vpop.permute.xlu0 %306
    %308 = vrot.lane.b32.xlu0 %v172, 96
    %v309 = vpop.permute.xlu0 %308
    %310 = vrot.lane.b32.xlu0 %v173, 96
    %v311 = vpop.permute.xlu0 %310
    %312 = vrot.lane.b32.xlu0 %v174, 96
    %v313 = vpop.permute.xlu0 %312
    %v315 = vsel %vm65, %v144, 0
    %v317 = vsel %vm65, %v307, 0
    %v319 = vsel %vm65, %v309, 0
    %v321 = vsel %vm65, %v311, 0
    %v323 = vsel %vm65, %v313, 0
    %325 = vmatprep.subr.mxu0 0.0
    %326 = vmatpush1.xpose.msra.mxu0 %v317
    %327 = vmatprep.subr.mxu0 0.0
    %328 = vmatpush1.xpose.msra.mxu0 %v319
    %329 = vmatprep.subr.mxu0 0.0
    %330 = vmatpush1.xpose.msra.mxu0 %v321
    %331 = vmatprep.subr.mxu0 0.0
    %332 = vmatpush1.xpose.msra.mxu0 %v323
    %333 = vmatprep.subr.mxu0 0.0
    %334 = vmatpush1.xpose.msra.mxu0 0.0
    %335 = vmatprep.subr.mxu0 0.0
    %336 = vmatpush1.xpose.msra.mxu0 0.0
    %337 = vmatprep.subr.mxu0 0.0
    %338 = vmatpush1.xpose.msra.mxu0 0.0
    %339 = vmatprep.subr.mxu0 0.0
    %340 = vmatpush1.xpose.msra.mxu0 0.0
    %341 = vmatprep.subr.mxu0 0.0
    %342 = vmatpush1.xpose.msra.mxu0 0.0
    %343 = vmatprep.subr.mxu0 0.0
    %344 = vmatpush1.xpose.msra.mxu0 0.0
    %345 = vmatprep.subr.mxu0 0.0
    %346 = vmatpush1.xpose.msra.mxu0 0.0
    %347 = vmatprep.subr.mxu0 0.0
    %348 = vmatpush1.xpose.msra.mxu0 0.0
    %349 = vmatprep.subr.mxu0 0.0
    %350 = vmatpush1.xpose.msra.mxu0 0.0
    %351 = vmatprep.subr.mxu0 0.0
    %352 = vmatpush1.xpose.msra.mxu0 0.0
    %353 = vmatprep.subr.mxu0 0.0
    %354 = vmatpush1.xpose.msra.mxu0 0.0
    %355 = vmatprep.subr.mxu0 0.0
    %356 = vmatpush1.xpose.msra.mxu0 0.0
    %357 = vmatprep.subr.mxu0 0.0
    %358 = vmatpush1.xpose.msra.mxu0 0.0
    %359 = vmatprep.subr.mxu0 0.0
    %360 = vmatpush1.xpose.msra.mxu0 0.0
    %361 = vmatprep.subr.mxu0 0.0
    %362 = vmatpush1.xpose.msra.mxu0 0.0
    %363 = vmatprep.subr.mxu0 0.0
    %364 = vmatpush1.xpose.msra.mxu0 0.0
    %365 = vmatprep.subr.mxu0 0.0
    %366 = vmatpush1.xpose.msra.mxu0 0.0
    %367 = vmatprep.subr.mxu0 0.0
    %368 = vmatpush1.xpose.msra.mxu0 0.0
    %369 = vmatprep.subr.mxu0 0.0
    %370 = vmatpush1.xpose.msra.mxu0 0.0
    %371 = vmatprep.subr.mxu0 0.0
    %372 = vmatpush1.xpose.msra.mxu0 0.0
    %373 = vmatprep.subr.mxu0 0.0
    %374 = vmatpush1.xpose.msra.mxu0 0.0
    %375 = vmatprep.subr.mxu0 0.0
    %376 = vmatpush1.xpose.msra.mxu0 0.0
    %377 = vmatprep.subr.mxu0 0.0
    %378 = vmatpush1.xpose.msra.mxu0 0.0
    %379 = vmatprep.subr.mxu0 0.0
    %380 = vmatpush1.xpose.msra.mxu0 0.0
    %381 = vmatprep.subr.mxu0 0.0
    %382 = vmatpush1.xpose.msra.mxu0 0.0
    %383 = vmatprep.subr.mxu0 0.0
    %384 = vmatpush1.xpose.msra.mxu0 0.0
    %385 = vmatprep.subr.mxu0 0.0
    %386 = vmatpush1.xpose.msra.mxu0 0.0
    %387 = vmatprep.subr.mxu0 0.0
    %388 = vmatpush1.xpose.msra.mxu0 0.0
    %389 = vmatprep.mubr.f32.mxu0 0.0
    %390 = vmatmul.mubr.f32.gmra.mrb[0].mxu0 %v315
    %v391 = vpop.f32.mrb[0].mxu0
    %v392 = vadd.f32 %v206, %v391
    %v393 = vpop.f32.mrb[0].mxu0
    %394 = vdwg.mxu0
    %v395 = vsel %vm65, %v299, -inf
    %396 = vmax.xlane.f32.xlu0 %v395
    %v397 = vpop.xlane.xlu0 %396
    %v398 = vsel %vm65, %v392, -inf
    %399 = vmax.xlane.f32.xlu0 %v398
    %v400 = vpop.xlane.xlu0 %399
    %v401 = vsub.f32 %v299, %v397
    %v402 = vsub.f32 %v392, %v400
    %v403 = vmul.f32 %v401, 1.442695
    %v404 = vpow.pop %v403
    %v405 = vmul.f32 %v402, 1.442695
    %v406 = vpow.pop %v405
    %v407 = vld [vmem:[#allocation5] sm:$0xff]
    %v408 = vld [vmem:[#allocation5 + $0x8] sm:$0xff]
    %v409 = vld [vmem:[#allocation5 + $0x10] sm:$0xff]
    %v410 = vld [vmem:[#allocation5 + $0x18] sm:$0xff]
    %v412 = vsel %vm65, %v404, 0
    %v415 = vsel %vm65, %v406, 0
    %417 = vmatprep.subr.mxu0 0.0
    %418 = vmatpush1.msra.mxu0 %v407
    %419 = vmatprep.subr.mxu0 0.0
    %420 = vmatpush1.msra.mxu0 %v408
    %421 = vmatprep.subr.mxu0 0.0
    %422 = vmatpush1.msra.mxu0 %v409
    %423 = vmatprep.subr.mxu0 0.0
    %424 = vmatpush1.msra.mxu0 %v410
    %425 = vmatprep.subr.mxu0 0.0
    %426 = vmatpush1.msra.mxu0 0.0
    %427 = vmatprep.subr.mxu0 0.0
    %428 = vmatpush1.msra.mxu0 0.0
    %429 = vmatprep.subr.mxu0 0.0
    %430 = vmatpush1.msra.mxu0 0.0
    %431 = vmatprep.subr.mxu0 0.0
    %432 = vmatpush1.msra.mxu0 0.0
    %433 = vmatprep.subr.mxu0 0.0
    %434 = vmatpush1.msra.mxu0 0.0
    %435 = vmatprep.subr.mxu0 0.0
    %436 = vmatpush1.msra.mxu0 0.0
    %437 = vmatprep.subr.mxu0 0.0
    %438 = vmatpush1.msra.mxu0 0.0
    %439 = vmatprep.subr.mxu0 0.0
    %440 = vmatpush1.msra.mxu0 0.0
    %441 = vmatprep.subr.mxu0 0.0
    %442 = vmatpush1.msra.mxu0 0.0
    %443 = vmatprep.subr.mxu0 0.0
    %444 = vmatpush1.msra.mxu0 0.0
    %445 = vmatprep.subr.mxu0 0.0
    %446 = vmatpush1.msra.mxu0 0.0
    %447 = vmatprep.subr.mxu0 0.0
    %448 = vmatpush1.msra.mxu0 0.0
    %449 = vmatprep.subr.mxu0 0.0
    %450 = vmatpush1.msra.mxu0 0.0
    %451 = vmatprep.subr.mxu0 0.0
    %452 = vmatpush1.msra.mxu0 0.0
    %453 = vmatprep.subr.mxu0 0.0
    %454 = vmatpush1.msra.mxu0 0.0
    %455 = vmatprep.subr.mxu0 0.0
    %456 = vmatpush1.msra.mxu0 0.0
    %457 = vmatprep.subr.mxu0 0.0
    %458 = vmatpush1.msra.mxu0 0.0
    %459 = vmatprep.subr.mxu0 0.0
    %460 = vmatpush1.msra.mxu0 0.0
    %461 = vmatprep.subr.mxu0 0.0
    %462 = vmatpush1.msra.mxu0 0.0
    %463 = vmatprep.subr.mxu0 0.0
    %464 = vmatpush1.msra.mxu0 0.0
    %465 = vmatprep.subr.mxu0 0.0
    %466 = vmatpush1.msra.mxu0 0.0
    %467 = vmatprep.subr.mxu0 0.0
    %468 = vmatpush1.msra.mxu0 0.0
    %469 = vmatprep.subr.mxu0 0.0
    %470 = vmatpush1.msra.mxu0 0.0
    %471 = vmatprep.subr.mxu0 0.0
    %472 = vmatpush1.msra.mxu0 0.0
    %473 = vmatprep.subr.mxu0 0.0
    %474 = vmatpush1.msra.mxu0 0.0
    %475 = vmatprep.subr.mxu0 0.0
    %476 = vmatpush1.msra.mxu0 0.0
    %477 = vmatprep.subr.mxu0 0.0
    %478 = vmatpush1.msra.mxu0 0.0
    %479 = vmatprep.subr.mxu0 0.0
    %480 = vmatpush1.msra.mxu0 0.0
    %481 = vmatprep.mubr.f32.mxu0 0.0
    %482 = vmatmul.mubr.f32.gmra.mrb[0].mxu0 %v412
    %v483 = vpop.f32.mrb[0].mxu0
    %v484 = vadd.f32 0.0, %v483
    %v485 = vpop.f32.mrb[0].mxu0
    %486 = vmatprep.mubr.f32.mxu0 0.0
    %487 = vmatmul.mubr.f32.gmra.mrb[0].mxu0 %v415
    %v488 = vpop.f32.mrb[0].mxu0
    %v489 = vadd.f32 0.0, %v488
    %v490 = vpop.f32.mrb[0].mxu0
    %491 = vdwg.mxu0
    %v492 = vrcp.pop %v484
    %v493 = vrcp.pop %v489
    %v494 = vmul.f32 %v404, %v492
    %v495 = vmul.f32 %v406, %v493
    %500 = vrot.lane.b32.xlu0 %v187, 64
    %v501 = vpop.permute.xlu0 %500
    %502 = vrot.lane.b32.xlu0 %v188, 64
    %v503 = vpop.permute.xlu0 %502
    %504 = vrot.lane.b32.xlu0 %v189, 64
    %v505 = vpop.permute.xlu0 %504
    %506 = vrot.lane.b32.xlu0 %v190, 64
    %v507 = vpop.permute.xlu0 %506
    %v513 = vsel %vm65, %v494, 0
    %515 = vmatprep.subr.mxu0 0.0
    %516 = vmatpush1.msra.mxu0 %v501
    %517 = vmatprep.subr.mxu0 0.0
    %518 = vmatpush1.msra.mxu0 %v503
    %519 = vmatprep.subr.mxu0 0.0
    %520 = vmatpush1.msra.mxu0 %v505
    %521 = vmatprep.subr.mxu0 0.0
    %522 = vmatpush1.msra.mxu0 %v507
    %523 = vmatprep.subr.mxu0 0.0
    %524 = vmatpush1.msra.mxu0 0.0
    %525 = vmatprep.subr.mxu0 0.0
    %526 = vmatpush1.msra.mxu0 0.0
    %527 = vmatprep.subr.mxu0 0.0
    %528 = vmatpush1.msra.mxu0 0.0
    %529 = vmatprep.subr.mxu0 0.0
    %530 = vmatpush1.msra.mxu0 0.0
    %531 = vmatprep.subr.mxu0 0.0
    %532 = vmatpush1.msra.mxu0 0.0
    %533 = vmatprep.subr.mxu0 0.0
    %534 = vmatpush1.msra.mxu0 0.0
    %535 = vmatprep.subr.mxu0 0.0
    %536 = vmatpush1.msra.mxu0 0.0
    %537 = vmatprep.subr.mxu0 0.0
    %538 = vmatpush1.msra.mxu0 0.0
    %539 = vmatprep.subr.mxu0 0.0
    %540 = vmatpush1.msra.mxu0 0.0
    %541 = vmatprep.subr.mxu0 0.0
    %542 = vmatpush1.msra.mxu0 0.0
    %543 = vmatprep.subr.mxu0 0.0
    %544 = vmatpush1.msra.mxu0 0.0
    %545 = vmatprep.subr.mxu0 0.0
    %546 = vmatpush1.msra.mxu0 0.0
    %547 = vmatprep.subr.mxu0 0.0
    %548 = vmatpush1.msra.mxu0 0.0
    %549 = vmatprep.subr.mxu0 0.0
    %550 = vmatpush1.msra.mxu0 0.0
    %551 = vmatprep.subr.mxu0 0.0
    %552 = vmatpush1.msra.mxu0 0.0
    %553 = vmatprep.subr.mxu0 0.0
    %554 = vmatpush1.msra.mxu0 0.0
    %555 = vmatprep.subr.mxu0 0.0
    %556 = vmatpush1.msra.mxu0 0.0
    %557 = vmatprep.subr.mxu0 0.0
    %558 = vmatpush1.msra.mxu0 0.0
    %559 = vmatprep.subr.mxu0 0.0
    %560 = vmatpush1.msra.mxu0 0.0
    %561 = vmatprep.subr.mxu0 0.0
    %562 = vmatpush1.msra.mxu0 0.0
    %563 = vmatprep.subr.mxu0 0.0
    %564 = vmatpush1.msra.mxu0 0.0
    %565 = vmatprep.subr.mxu0 0.0
    %566 = vmatpush1.msra.mxu0 0.0
    %567 = vmatprep.subr.mxu0 0.0
    %568 = vmatpush1.msra.mxu0 0.0
    %569 = vmatprep.subr.mxu0 0.0
    %570 = vmatpush1.msra.mxu0 0.0
    %571 = vmatprep.subr.mxu0 0.0
    %572 = vmatpush1.msra.mxu0 0.0
    %573 = vmatprep.subr.mxu0 0.0
    %574 = vmatpush1.msra.mxu0 0.0
    %575 = vmatprep.subr.mxu0 0.0
    %576 = vmatpush1.msra.mxu0 0.0
    %577 = vmatprep.subr.mxu0 0.0
    %578 = vmatpush1.msra.mxu0 0.0
    %579 = vmatprep.mubr.f32.mxu0 0.0
    %580 = vmatmul.mubr.f32.gmra.mrb[0].mxu0 %v513
    %v581 = vpop.f32.mrb[0].mxu0
    %v582 = vadd.f32 0.0, %v581
    %v583 = vpop.f32.mrb[0].mxu0
    %584 = vdwg.mxu0
    %589 = vrot.lane.b32.xlu0 %v191, 64
    %v590 = vpop.permute.xlu0 %589
    %591 = vrot.lane.b32.xlu0 %v192, 64
    %v592 = vpop.permute.xlu0 %591
    %593 = vrot.lane.b32.xlu0 %v193, 64
    %v594 = vpop.permute.xlu0 %593
    %595 = vrot.lane.b32.xlu0 %v194, 64
    %v596 = vpop.permute.xlu0 %595
    %v602 = vsel %vm65, %v495, 0
    %604 = vmatprep.subr.mxu0 0.0
    %605 = vmatpush1.msra.mxu0 %v590
    %606 = vmatprep.subr.mxu0 0.0
    %607 = vmatpush1.msra.mxu0 %v592
    %608 = vmatprep.subr.mxu0 0.0
    %609 = vmatpush1.msra.mxu0 %v594
    %610 = vmatprep.subr.mxu0 0.0
    %611 = vmatpush1.msra.mxu0 %v596
    %612 = vmatprep.subr.mxu0 0.0
    %613 = vmatpush1.msra.mxu0 0.0
    %614 = vmatprep.subr.mxu0 0.0
    %615 = vmatpush1.msra.mxu0 0.0
    %616 = vmatprep.subr.mxu0 0.0
    %617 = vmatpush1.msra.mxu0 0.0
    %618 = vmatprep.subr.mxu0 0.0
    %619 = vmatpush1.msra.mxu0 0.0
    %620 = vmatprep.subr.mxu0 0.0
    %621 = vmatpush1.msra.mxu0 0.0
    %622 = vmatprep.subr.mxu0 0.0
    %623 = vmatpush1.msra.mxu0 0.0
    %624 = vmatprep.subr.mxu0 0.0
    %625 = vmatpush1.msra.mxu0 0.0
    %626 = vmatprep.subr.mxu0 0.0
    %627 = vmatpush1.msra.mxu0 0.0
    %628 = vmatprep.subr.mxu0 0.0
    %629 = vmatpush1.msra.mxu0 0.0
    %630 = vmatprep.subr.mxu0 0.0
    %631 = vmatpush1.msra.mxu0 0.0
    %632 = vmatprep.subr.mxu0 0.0
    %633 = vmatpush1.msra.mxu0 0.0
    %634 = vmatprep.subr.mxu0 0.0
    %635 = vmatpush1.msra.mxu0 0.0
    %636 = vmatprep.subr.mxu0 0.0
    %637 = vmatpush1.msra.mxu0 0.0
    %638 = vmatprep.subr.mxu0 0.0
    %639 = vmatpush1.msra.mxu0 0.0
    %640 = vmatprep.subr.mxu0 0.0
    %641 = vmatpush1.msra.mxu0 0.0
    %642 = vmatprep.subr.mxu0 0.0
    %643 = vmatpush1.msra.mxu0 0.0
    %644 = vmatprep.subr.mxu0 0.0
    %645 = vmatpush1.msra.mxu0 0.0
    %646 = vmatprep.subr.mxu0 0.0
    %647 = vmatpush1.msra.mxu0 0.0
    %648 = vmatprep.subr.mxu0 0.0
    %649 = vmatpush1.msra.mxu0 0.0
    %650 = vmatprep.subr.mxu0 0.0
    %651 = vmatpush1.msra.mxu0 0.0
    %652 = vmatprep.subr.mxu0 0.0
    %653 = vmatpush1.msra.mxu0 0.0
    %654 = vmatprep.subr.mxu0 0.0
    %655 = vmatpush1.msra.mxu0 0.0
    %656 = vmatprep.subr.mxu0 0.0
    %657 = vmatpush1.msra.mxu0 0.0
    %658 = vmatprep.subr.mxu0 0.0
    %659 = vmatpush1.msra.mxu0 0.0
    %660 = vmatprep.subr.mxu0 0.0
    %661 = vmatpush1.msra.mxu0 0.0
    %662 = vmatprep.subr.mxu0 0.0
    %663 = vmatpush1.msra.mxu0 0.0
    %664 = vmatprep.subr.mxu0 0.0
    %665 = vmatpush1.msra.mxu0 0.0
    %666 = vmatprep.subr.mxu0 0.0
    %667 = vmatpush1.msra.mxu0 0.0
    %668 = vmatprep.mubr.f32.mxu0 0.0
    %669 = vmatmul.mubr.f32.gmra.mrb[0].mxu0 %v602
    %v670 = vpop.f32.mrb[0].mxu0
    %v671 = vadd.f32 0.0, %v670
    %v672 = vpop.f32.mrb[0].mxu0
    %673 = vdwg.mxu0
    %674 = vst.msk [vmem:[#allocation7] sm:$0xff] %vm65, %v582
    %675 = vst.msk [vmem:[#allocation7 + $0x8] sm:$0xff] %vm65, %v671
    // Predicated region
    $region34: #{cross_self_attention.1} parent=1 // pred_check
      _
    $region35: #{cross_self_attention.1} parent=1 // pred_check_branch
      %677 = sbr.rel (0) target = $region37
    $region36: #{cross_self_attention.1} parent=1 // pred_region
      %s679 = ssub.s32 256, 256
      %680 = vsyncadd [#allocation4], %s679
      %s681 = sshll.u32 [#allocation7], 4
      %s682 = int_to_ptr.vmem [resolvable:$true] %s681
      %687 = dma.vmem_to_hbm [thread:$0]  %s682, 256, %s6, [#allocation4], 128, 128, 8
    $region37: #{cross_self_attention.1} parent=1 // pred_fallthru
      _
    // Predicated region
    $region38: #{cross_self_attention.1} parent=1 // pred_check
      _
    $region39: #{cross_self_attention.1} parent=1 // pred_check_branch
      %689 = sbr.rel (0) target = $region41
    $region40: #{cross_self_attention.1} parent=1 // pred_region
      %690 = dma.done [#allocation4], 256
    $region41: #{cross_self_attention.1} parent=1 // pred_fallthru
      _
    %691 = vsyncpa [#allocation3], 1
    %692 = vsyncpa [#allocation6], 1
    %693 = vsyncpa [#allocation4], 1

</llo_original>
